<compile_context>
chip_gen: v7x
topology: tpu7x:2x2x1
jax: 0.10.0
libtpu: 0.0.40
codegen_flags: <defaults>
</compile_context>

<pallas_src>
import functools

import jax
import jax.numpy as jnp
from jax.experimental import pallas as pl
from jax.experimental.pallas import tpu as pltpu

EPS = 1e-5                      # nn.LayerNorm default
_LANE = 128                     # vreg lane width
_VMEM_LIMIT = 32 * 1024 * 1024  # explicit scoped-VMEM limit (fits v5e/v6e/v7x)
_VMEM_TILE_BUDGET = 16 * 1024 * 1024  # working-set target; leaves headroom


def _round_up(x, m):
    return ((x + m - 1) // m) * m


def _sublane(dtype):
    # f32 -> 8 sublanes per vreg, 16-bit dtypes pack 2x along sublanes.
    return 16 if jnp.dtype(dtype).itemsize == 2 else 8


def _pick_block_rows(rows, in_cols, out_cols, in_dtype, out_dtype, resident_bytes=0):
    """Pick a row-tile size from the VMEM budget (double-buffered in/out + f32 temps)."""
    sub = max(_sublane(in_dtype), _sublane(out_dtype))
    budget = max(_VMEM_TILE_BUDGET - resident_bytes, 2 * 1024 * 1024)
    per_row = (
        2 * in_cols * jnp.dtype(in_dtype).itemsize      # double-buffered input tile
        + 2 * out_cols * jnp.dtype(out_dtype).itemsize  # double-buffered output tile
        + 3 * in_cols * 4                               # ~3 f32 temporaries in-kernel
    )
    tm = max(sub, budget // max(per_row, 1))
    tm = min(tm, 1024, _round_up(rows, sub))
    tm = (tm // sub) * sub
    return max(tm, sub)


def _ln_body(x_ref, g_ref, b_ref, inv_d):
    """Single-pass LayerNorm of a (tm, D_pad) row block. Padded lanes -> 0 (gamma/beta=0)."""
    x = x_ref[...].astype(jnp.float32)
    s = jnp.sum(x, axis=-1, keepdims=True)
    sq = jnp.sum(x * x, axis=-1, keepdims=True)
    mean = s * inv_d
    var = sq * inv_d - mean * mean          # E[x^2] - mean^2 (single pass, f32)
    inv = jax.lax.rsqrt(var + EPS)
    gamma = g_ref[...].astype(jnp.float32)  # (1, D_pad), broadcasts over rows
    beta = b_ref[...].astype(jnp.float32)
    return (x - mean) * inv * gamma + beta


def _layernorm_kernel(x_ref, g_ref, b_ref, o_ref, *, inv_d):
    y = _ln_body(x_ref, g_ref, b_ref, inv_d)
    o_ref[...] = y.astype(o_ref.dtype)


def _layernorm_linear_kernel(x_ref, g_ref, b_ref, w_ref, o_ref, *, inv_d):
    y = _ln_body(x_ref, g_ref, b_ref, inv_d)  # padded lanes are exactly 0
    o_ref[...] = jnp.dot(
        y.astype(w_ref.dtype), w_ref[...], preferred_element_type=jnp.float32
    ).astype(o_ref.dtype)


@functools.partial(jax.jit, static_argnames=("block_rows",))
def layer_norm_pallas(x, gamma, beta, *, block_rows=None):
    """LayerNorm over the last dim of x (any leading shape) via Pallas."""
    orig_shape = x.shape
    d = orig_shape[-1]
    x2 = x.reshape(-1, d)
    rows = x2.shape[0]
    d_pad = _round_up(d, _LANE)

    tm = block_rows if block_rows is not None else _pick_block_rows(
        rows, d_pad, d_pad, x.dtype, x.dtype)
    rows_pad = _round_up(rows, tm)

    # Zero-pad: padded columns contribute 0 to sum/sum-sq (divide by true d);
    # padded rows are sliced away afterwards.
    x2 = jnp.pad(x2, ((0, rows_pad - rows), (0, d_pad - d)))
    g2 = jnp.pad(gamma, ((0, d_pad - d),)).reshape(1, d_pad)
    b2 = jnp.pad(beta, ((0, d_pad - d),)).reshape(1, d_pad)

    kernel = functools.partial(_layernorm_kernel, inv_d=1.0 / d)

    out = pl.pallas_call(
        kernel,
        out_shape=jax.ShapeDtypeStruct((rows_pad, d_pad), x.dtype),
        grid_spec=pltpu.PrefetchScalarGridSpec(
            num_scalar_prefetch=0,
            grid=(rows_pad // tm,),
            in_specs=[
                pl.BlockSpec((tm, d_pad), lambda i: (i, 0)),
                pl.BlockSpec((1, d_pad), lambda i: (0, 0)),   # VMEM-resident gamma
                pl.BlockSpec((1, d_pad), lambda i: (0, 0)),   # VMEM-resident beta
            ],
            out_specs=pl.BlockSpec((tm, d_pad), lambda i: (i, 0)),
        ),
        compiler_params=pltpu.CompilerParams(
            dimension_semantics=("parallel",),
            vmem_limit_bytes=_VMEM_LIMIT,
        ),
    )(x2, g2, b2)
    return out[:rows, :d].reshape(orig_shape)


@jax.jit
def prenorm_linear_pallas(x, gamma, beta, w):
    """Fused PreNorm for linear fn: (LayerNorm(x)) @ w in one kernel (no HBM round-trip)."""
    orig_shape = x.shape
    d = orig_shape[-1]
    n = w.shape[-1]
    x2 = x.reshape(-1, d)
    rows = x2.shape[0]
    d_pad = _round_up(d, _LANE)
    n_pad = _round_up(n, _LANE)

    w_bytes = 2 * d_pad * n_pad * jnp.dtype(w.dtype).itemsize  # resident weight (buffered)
    tm = _pick_block_rows(rows, d_pad, n_pad, x.dtype, x.dtype, resident_bytes=w_bytes)
    rows_pad = _round_up(rows, tm)

    x2 = jnp.pad(x2, ((0, rows_pad - rows), (0, d_pad - d)))
    g2 = jnp.pad(gamma, ((0, d_pad - d),)).reshape(1, d_pad)
    b2 = jnp.pad(beta, ((0, d_pad - d),)).reshape(1, d_pad)
    w2 = jnp.pad(w, ((0, d_pad - d), (0, n_pad - n)))

    kernel = functools.partial(_layernorm_linear_kernel, inv_d=1.0 / d)

    out = pl.pallas_call(
        kernel,
        out_shape=jax.ShapeDtypeStruct((rows_pad, n_pad), x.dtype),
        grid_spec=pltpu.PrefetchScalarGridSpec(
            num_scalar_prefetch=0,
            grid=(rows_pad // tm,),
            in_specs=[
                pl.BlockSpec((tm, d_pad), lambda i: (i, 0)),
                pl.BlockSpec((1, d_pad), lambda i: (0, 0)),
                pl.BlockSpec((1, d_pad), lambda i: (0, 0)),
                pl.BlockSpec((d_pad, n_pad), lambda i: (0, 0)),  # resident weight tile
            ],
            out_specs=pl.BlockSpec((tm, n_pad), lambda i: (i, 0)),
        ),
        compiler_params=pltpu.CompilerParams(
            dimension_semantics=("parallel",),
            vmem_limit_bytes=_VMEM_LIMIT,
        ),
    )(x2, g2, b2, w2)
    return out[:rows, :n].reshape(orig_shape[:-1] + (n,))


class PreNormPallas:
    """PreNorm: x -> fn(LayerNorm(x), **kwargs). LayerNorm runs in Pallas.

    If `fused_linear_weight` is given (i.e. fn is that linear projection), the
    LayerNorm + matmul are fused in one Pallas kernel (no HBM round-trip of the
    normalized activations). Otherwise `fn` is arbitrary JAX glue.
    """

    def __init__(self, hidden_dim, fn, gamma=None, beta=None, fused_linear_weight=None):
        self.hidden_dim = hidden_dim
        self.fn = fn
        # nn.LayerNorm default init: weight=1, bias=0 (shapes: (hidden_dim,))
        self.gamma = gamma if gamma is not None else jnp.ones((hidden_dim,), jnp.float32)
        self.beta = beta if beta is not None else jnp.zeros((hidden_dim,), jnp.float32)
        self.fused_linear_weight = fused_linear_weight

    def __call__(self, x, **kwargs):
        if self.fused_linear_weight is not None and not kwargs:
            return prenorm_linear_pallas(x, self.gamma, self.beta, self.fused_linear_weight)
        # TODO(synk): arbitrary `fn` stays plain JAX; only LayerNorm (and the
        # common linear-fn case above) run inside Pallas.
        return self.fn(layer_norm_pallas(x, self.gamma, self.beta), **kwargs)


def _layer_norm_ref(x, gamma, beta):
    mean = jnp.mean(x, axis=-1, keepdims=True)
    var = jnp.mean((x - mean) ** 2, axis=-1, keepdims=True)
    return (x - mean) * jax.lax.rsqrt(var + EPS) * gamma + beta


if __name__ == "__main__":
    key = jax.random.PRNGKey(0)
    k_x, k_g, k_b, k_w = jax.random.split(key, 4)

    B, S, D = 2, 8, 32  # batch, seq, hidden_dim (demo shape; D padded to 128 internally)
    x = jax.random.normal(k_x, (B, S, D), dtype=jnp.float32)

    # Deterministic (non-trivial) LayerNorm affine params.
    gamma = 1.0 + 0.1 * jax.random.normal(k_g, (D,), dtype=jnp.float32)
    beta = 0.1 * jax.random.normal(k_b, (D,), dtype=jnp.float32)

    # Example wrapped fn: a simple linear projection.
    w_fn = 0.05 * jax.random.normal(k_w, (D, D), dtype=jnp.float32)
    fn = lambda y: y @ w_fn

    ref = fn(_layer_norm_ref(x, gamma, beta))

    # Generic path: Pallas LayerNorm + plain-JAX fn.
    prenorm = PreNormPallas(D, fn, gamma=gamma, beta=beta)
    out_generic = jax.block_until_ready(prenorm(x))
    assert out_generic.shape == (B, S, D)
    assert jnp.allclose(out_generic, ref, atol=1e-4, rtol=1e-4), "generic path mismatch"

    # Fused path: LayerNorm + matmul in one Pallas kernel.
    prenorm_fused = PreNormPallas(D, fn, gamma=gamma, beta=beta, fused_linear_weight=w_fn)
    out_fused = jax.block_until_ready(prenorm_fused(x))
    assert out_fused.shape == (B, S, D)
    assert jnp.allclose(out_fused, ref, atol=1e-4, rtol=1e-4), "fused path mismatch"

    print("KERNEL_OK")
</pallas_src>

<mosaic_0001>
module attributes {stable_mosaic.version = 11 : i64} {
  func.func @_layernorm_kernel(%arg0: i32, %arg1: memref<16x128xf32, #tpu.memory_space<vmem>>, %arg2: memref<1x128xf32, #tpu.memory_space<vmem>>, %arg3: memref<1x128xf32, #tpu.memory_space<vmem>>, %arg4: memref<16x128xf32, #tpu.memory_space<vmem>>) attributes {dimension_semantics = [#tpu.dimension_semantics<parallel>], iteration_bounds = array<i64: 1>, scalar_prefetch = 0 : i64, scratch_operands = 0 : i64, tpu.core_type = #tpu.core_type<tc>, window_params = [{transform_indices = @transform_0, window_bounds = array<i64: 16, 128>}, {pipeline_mode = #tpu.pipeline_mode<synchronous>, transform_indices = @transform_1, window_bounds = array<i64: 1, 128>}, {pipeline_mode = #tpu.pipeline_mode<synchronous>, transform_indices = @transform_2, window_bounds = array<i64: 1, 128>}, {transform_indices = @transform_3, window_bounds = array<i64: 16, 128>}]} {
    %c0 = arith.constant 0 : index
    %c0_0 = arith.constant 0 : index
    %0 = vector.load %arg1[%c0, %c0_0] : memref<16x128xf32, #tpu.memory_space<vmem>>, vector<16x128xf32>
    %cst = arith.constant dense<0.000000e+00> : vector<16xf32>
    %1 = vector.multi_reduction <add>, %0, %cst [1] : vector<16x128xf32> to vector<16xf32>
    %2 = vector.shape_cast %1 : vector<16xf32> to vector<16x1xf32>
    %3 = arith.mulf %0, %0 : vector<16x128xf32>
    %cst_1 = arith.constant dense<0.000000e+00> : vector<16xf32>
    %4 = vector.multi_reduction <add>, %3, %cst_1 [1] : vector<16x128xf32> to vector<16xf32>
    %5 = vector.shape_cast %4 : vector<16xf32> to vector<16x1xf32>
    %cst_2 = arith.constant 3.125000e-02 : f32
    %6 = vector.broadcast %cst_2 : f32 to vector<16x1xf32>
    %7 = arith.mulf %2, %6 : vector<16x1xf32>
    %cst_3 = arith.constant 3.125000e-02 : f32
    %8 = vector.broadcast %cst_3 : f32 to vector<16x1xf32>
    %9 = arith.mulf %5, %8 : vector<16x1xf32>
    %10 = arith.mulf %7, %7 : vector<16x1xf32>
    %11 = arith.subf %9, %10 : vector<16x1xf32>
    %cst_4 = arith.constant 9.99999974E-6 : f32
    %12 = vector.broadcast %cst_4 : f32 to vector<16x1xf32>
    %13 = arith.addf %11, %12 : vector<16x1xf32>
    %14 = math.rsqrt %13 : vector<16x1xf32>
    %c0_5 = arith.constant 0 : index
    %c0_6 = arith.constant 0 : index
    %15 = vector.load %arg2[%c0_5, %c0_6] : memref<1x128xf32, #tpu.memory_space<vmem>>, vector<1x128xf32>
    %c0_7 = arith.constant 0 : index
    %c0_8 = arith.constant 0 : index
    %16 = vector.load %arg3[%c0_7, %c0_8] : memref<1x128xf32, #tpu.memory_space<vmem>>, vector<1x128xf32>
    %17 = vector.broadcast %7 : vector<16x1xf32> to vector<16x128xf32>
    %18 = arith.subf %0, %17 : vector<16x128xf32>
    %19 = vector.broadcast %14 : vector<16x1xf32> to vector<16x128xf32>
    %20 = arith.mulf %18, %19 : vector<16x128xf32>
    %21 = vector.broadcast %15 : vector<1x128xf32> to vector<16x128xf32>
    %22 = arith.mulf %20, %21 : vector<16x128xf32>
    %23 = vector.broadcast %16 : vector<1x128xf32> to vector<16x128xf32>
    %24 = arith.addf %22, %23 : vector<16x128xf32>
    %c0_9 = arith.constant 0 : index
    %c0_10 = arith.constant 0 : index
    %25 = vector.load %arg4[%c0_9, %c0_10] : memref<16x128xf32, #tpu.memory_space<vmem>>, vector<16x128xf32>
    tpu.vector_store %arg4[%c0_9, %c0_10], %24 {strides = array<i32>} : memref<16x128xf32, #tpu.memory_space<vmem>>, vector<16x128xf32>,
    return
  }
  func.func @transform_0(%arg0: i32) -> (i32, i32) {
    %c0_i32 = arith.constant 0 : i32
    %c0_i32_0 = arith.constant 0 : i32
    return %arg0, %c0_i32 : i32, i32
  }
  func.func @transform_1(%arg0: i32) -> (i32, i32) {
    %c0_i32 = arith.constant 0 : i32
    %c0_i32_0 = arith.constant 0 : i32
    %c0_i32_1 = arith.constant 0 : i32
    return %c0_i32, %c0_i32_0 : i32, i32
  }
  func.func @transform_2(%arg0: i32) -> (i32, i32) {
    %c0_i32 = arith.constant 0 : i32
    %c0_i32_0 = arith.constant 0 : i32
    %c0_i32_1 = arith.constant 0 : i32
    return %c0_i32, %c0_i32_0 : i32, i32
  }
  func.func @transform_3(%arg0: i32) -> (i32, i32) {
    %c0_i32 = arith.constant 0 : i32
    %c0_i32_0 = arith.constant 0 : i32
    return %arg0, %c0_i32 : i32, i32
  }
}

</mosaic_0001>

<llo_original>
// kernel: layer_norm_pallas.1
$region0: #{layer_norm_pallas.1}
  #allocation0 [shape = 'u32[]', space=smem, size = 0x4, offset = 0x4, fixed_abs, tag = 'smem constant byte address 0x4 - core index']
  #allocation1 [shape = 'u32[144,128]{1,0:T(1,128)}', space=vmem, size = 0x12000, scoped, tag = 'internal scratch']
  %s0 = inlined_call_operand.vmem [shape: f32[16,128], index: 0, kind: input, shape index: {}]
  %s1 = inlined_call_operand.vmem [shape: f32[1,128], index: 1, kind: input, shape index: {}]
  %s2 = inlined_call_operand.vmem [shape: f32[1,128], index: 2, kind: input, shape index: {}]
  %s3 = inlined_call_operand.vmem [shape: f32[16,128], index: 3, kind: output, shape index: {}]
  %s4 = sld [smem:[#allocation0]]
  $region22: #{layer_norm_pallas.1} parent=0
    _
  %s6 = ssub.s32 1, %s4
  %s7 = scalar_select 0, %s6, %s4
  // Predicated region
  $region2: #{layer_norm_pallas.1} parent=0 // pred_check
    _
  $region3: #{layer_norm_pallas.1} parent=0 // pred_check_branch
    %9 = sbr.rel (0) target = $region5
  $region4: #{layer_norm_pallas.1} parent=0 // pred_region
    _
  $region5: #{layer_norm_pallas.1} parent=0 // pred_fallthru
    _
  // Predicated region
  $region6: #{layer_norm_pallas.1} parent=0 // pred_check
    _
  $region7: #{layer_norm_pallas.1} parent=0 // pred_check_branch
    %11 = sbr.rel (0) target = $region9
  $region8: #{layer_norm_pallas.1} parent=0 // pred_region
    _
  $region9: #{layer_norm_pallas.1} parent=0 // pred_fallthru
    _
  // Predicated region
  $region10: #{layer_norm_pallas.1} parent=0 // pred_check
    _
  $region11: #{layer_norm_pallas.1} parent=0 // pred_check_branch
    %13 = sbr.rel (0) target = $region13
  $region12: #{layer_norm_pallas.1} parent=0 // pred_region
    _
  $region13: #{layer_norm_pallas.1} parent=0 // pred_fallthru
    _
  %v14 = vld [vmem:[%s0] sm:$0xff]
  %v15 = vld [vmem:[%s0 + $0x8] sm:$0xff]
  %16 = vadd.xlane.f32.xlu0 %v14
  %v17 = vpop.xlane.xlu0 %16
  %18 = vadd.xlane.f32.xlu0 %v15
  %v19 = vpop.xlane.xlu0 %18
  %v20 = vmul.f32 %v14, %v14
  %v21 = vmul.f32 %v15, %v15
  %22 = vadd.xlane.f32.xlu0 %v20
  %v23 = vpop.xlane.xlu0 %22
  %24 = vadd.xlane.f32.xlu0 %v21
  %v25 = vpop.xlane.xlu0 %24
  %v26 = vmul.f32 %v17, 0.03125
  %v27 = vmul.f32 %v19, 0.03125
  %v28 = vmul.f32 %v23, 0.03125
  %v29 = vmul.f32 %v25, 0.03125
  %v30 = vmul.f32 %v26, %v26
  %v31 = vmul.f32 %v27, %v27
  %v32 = vsub.f32 %v28, %v30
  %v33 = vsub.f32 %v29, %v31
  %v34 = vadd.f32 %v32, 1e-05
  %v35 = vadd.f32 %v33, 1e-05
  %v36 = vrsqrt.pop %v34
  %v37 = vrsqrt.pop %v35
  %v38 = vld [vmem:[%s1] sm:$0x1]
  %v39 = vld [vmem:[%s2] sm:$0x1]
  %v40 = vsub.f32 %v14, %v26
  %v41 = vsub.f32 %v15, %v27
  %v42 = vmul.f32 %v40, %v36
  %v43 = vmul.f32 %v41, %v37
  %v45 = vlaneseq
  %v46 = vshrl.u32 %v45, 7
  %v47 = vsub.s32 0, %v46
  %v48 = vrot.slane %v38, %v47
  %v50 = vmul.f32 %v42, %v48
  %v51 = vmul.f32 %v43, %v48
  %v53 = vlaneseq
  %v54 = vshrl.u32 %v53, 7
  %v55 = vsub.s32 0, %v54
  %v56 = vrot.slane %v39, %v55
  %v58 = vadd.f32 %v50, %v56
  %v59 = vadd.f32 %v51, %v56
  %60 = vst [vmem:[%s3] sm:$0xff] %v58
  %61 = vst [vmem:[%s3 + $0x8] sm:$0xff] %v59
  // Predicated region
  $region14: #{layer_norm_pallas.1} parent=0 // pred_check
    _
  $region15: #{layer_norm_pallas.1} parent=0 // pred_check_branch
    %63 = sbr.rel (0) target = $region17
  $region16: #{layer_norm_pallas.1} parent=0 // pred_region
    _
  $region17: #{layer_norm_pallas.1} parent=0 // pred_fallthru
    _
  // Predicated region
  $region18: #{layer_norm_pallas.1} parent=0 // pred_check
    _
  $region19: #{layer_norm_pallas.1} parent=0 // pred_check_branch
    %65 = sbr.rel (0) target = $region21
  $region20: #{layer_norm_pallas.1} parent=0 // pred_region
    _
  $region21: #{layer_norm_pallas.1} parent=0 // pred_fallthru
    _

</llo_original>
